<compile_context>
chip_gen: v7x
topology: tpu7x:2x2x1
jax: 0.10.0
libtpu: 0.0.40
codegen_flags: <defaults>
</compile_context>

<pallas_src>
import jax
import jax.numpy as jnp
from jax.experimental import pallas as pl
from jax.experimental.pallas import tpu as pltpu

BVAE_LATENT = 24
ACTION_DIM = 8
HIDDEN = 32
IN_DIM = BVAE_LATENT + ACTION_DIM   # 32
FUSED = 2 * HIDDEN                  # 64 (both heads side by side)

# Slab row layout (all starts sublane(8)-aligned for f32).
ROW_W14 = 0          # rows   0: 32  -> fused layer-1 weight [IN_DIM, 64]
ROW_B14 = 32         # row   32      -> fused layer-1 bias   [1, 64]
ROW_B25 = 40         # row   40      -> fused layer-2 bias   [1, 64]
ROW_B36 = 48         # row   48      -> fused layer-3 bias   [1, 64] (lanes 0,1 used)
ROW_W25 = 56         # rows  56:120  -> block-diag layer-2 weight [64, 64]
ROW_W36 = 120        # rows 120:184  -> layer-3 weight padded to  [64, 64] (cols 0,1 used)
SLAB_ROWS = 184


def _critic_kernel(state_ref, action_ref, slab_ref, out_ref):
    # Static, aligned views into the parameter slab (no data movement).
    ws  = slab_ref[ROW_W14:ROW_W14 + BVAE_LATENT, :]            # [24, 64]
    wa  = slab_ref[ROW_W14 + BVAE_LATENT:ROW_W14 + IN_DIM, :]   # [ 8, 64]
    b1  = slab_ref[ROW_B14:ROW_B14 + 1, :]                      # [ 1, 64]
    b2  = slab_ref[ROW_B25:ROW_B25 + 1, :]                      # [ 1, 64]
    b3  = slab_ref[ROW_B36:ROW_B36 + 1, :]                      # [ 1, 64]
    w25 = slab_ref[ROW_W25:ROW_W25 + FUSED, :]                  # [64, 64]
    w36 = slab_ref[ROW_W36:ROW_W36 + FUSED, :]                  # [64, 64]

    # Layer 1 (both heads): split matmul replaces the concat([state, action]).
    h = (jnp.dot(state_ref[...], ws, preferred_element_type=jnp.float32)
         + jnp.dot(action_ref[...], wa, preferred_element_type=jnp.float32)
         + b1)
    h = jnp.maximum(h, 0.0)

    # Layer 2 (block-diagonal keeps the heads independent).
    h = jnp.maximum(
        jnp.dot(h, w25, preferred_element_type=jnp.float32) + b2, 0.0)

    # Layer 3: only lanes 0 (q1) and 1 (q2) are meaningful.
    q = jnp.dot(h, w36, preferred_element_type=jnp.float32) + b3
    out_ref[...] = q[:, :2]


def critic_forward(state, action, slab):
    """Returns (q1, q2), each [B, 1]. slab is the packed parameter slab."""
    B = state.shape[0]
    B_pad = ((B + 7) // 8) * 8                 # keep sublanes unmasked
    if B_pad != B:
        pad = B_pad - B
        state = jnp.pad(state, ((0, pad), (0, 0)))
        action = jnp.pad(action, ((0, pad), (0, 0)))

    vmem = pl.BlockSpec(memory_space=pltpu.MemorySpace.VMEM)
    flops = 2 * B_pad * (BVAE_LATENT * FUSED + ACTION_DIM * FUSED
                         + FUSED * FUSED + FUSED * FUSED)
    bytes_accessed = 4 * (slab.size + state.size + action.size + B_pad * 2)

    q = pl.pallas_call(
        _critic_kernel,
        out_shape=jax.ShapeDtypeStruct((B_pad, 2), jnp.float32),
        in_specs=[vmem, vmem, vmem],
        out_specs=vmem,
        cost_estimate=pl.CostEstimate(
            flops=flops, transcendentals=0, bytes_accessed=bytes_accessed),
    )(state, action, slab)

    return q[:B, 0:1], q[:B, 1:2]
    # TODO(synk): for training-scale batches, add a batch grid axis with
    # dimension_semantics=("parallel",) and weights mapped to block (0, 0).


def init_raw_params(key):
    """PyTorch nn.Linear-style init: weight [out, in], bias [out]."""
    dims = [
        (IN_DIM, HIDDEN),   # l1
        (HIDDEN, HIDDEN),   # l2
        (HIDDEN, 1),        # l3
        (IN_DIM, HIDDEN),   # l4
        (HIDDEN, HIDDEN),   # l5
        (HIDDEN, 1),        # l6
    ]
    raw = {}
    for i, (din, dout) in enumerate(dims, start=1):
        key, kw, kb = jax.random.split(key, 3)
        bound = 1.0 / jnp.sqrt(jnp.float32(din))
        raw[f"w{i}"] = jax.random.uniform(kw, (dout, din), jnp.float32, -bound, bound)
        raw[f"b{i}"] = jax.random.uniform(kb, (dout,), jnp.float32, -bound, bound)
    return raw


def pack_slab(raw):
    """Pack all six Linear layers into one [SLAB_ROWS, 64] f32 slab."""
    slab = jnp.zeros((SLAB_ROWS, FUSED), jnp.float32)

    # Layer 1: [W1.T || W4.T] -> [32, 64]
    w14 = jnp.concatenate([raw["w1"].T, raw["w4"].T], axis=1)
    slab = slab.at[ROW_W14:ROW_W14 + IN_DIM, :].set(w14)
    slab = slab.at[ROW_B14, :].set(jnp.concatenate([raw["b1"], raw["b4"]]))

    # Layer 2: block-diagonal of W2.T / W5.T -> [64, 64]
    slab = slab.at[ROW_W25:ROW_W25 + HIDDEN, 0:HIDDEN].set(raw["w2"].T)
    slab = slab.at[ROW_W25 + HIDDEN:ROW_W25 + FUSED, HIDDEN:FUSED].set(raw["w5"].T)
    slab = slab.at[ROW_B25, :].set(jnp.concatenate([raw["b2"], raw["b5"]]))

    # Layer 3: block-diagonal of W3.T / W6.T -> [64, 2], stored in cols 0 and 1.
    slab = slab.at[ROW_W36:ROW_W36 + HIDDEN, 0:1].set(raw["w3"].T)
    slab = slab.at[ROW_W36 + HIDDEN:ROW_W36 + FUSED, 1:2].set(raw["w6"].T)
    slab = slab.at[ROW_B36, 0].set(raw["b3"][0])
    slab = slab.at[ROW_B36, 1].set(raw["b6"][0])
    return slab


def critic_ref(state, action, raw):
    """Pure-JAX reference matching the PyTorch module."""
    sa = jnp.concatenate([state, action], axis=1)
    h = jnp.maximum(sa @ raw["w1"].T + raw["b1"], 0.0)
    h = jnp.maximum(h @ raw["w2"].T + raw["b2"], 0.0)
    q1 = h @ raw["w3"].T + raw["b3"]
    g = jnp.maximum(sa @ raw["w4"].T + raw["b4"], 0.0)
    g = jnp.maximum(g @ raw["w5"].T + raw["b5"], 0.0)
    q2 = g @ raw["w6"].T + raw["b6"]
    return q1, q2


if __name__ == "__main__":
    key = jax.random.PRNGKey(0)
    kp, ks, ka = jax.random.split(key, 3)

    batch = 2
    state = jax.random.normal(ks, (batch, BVAE_LATENT), jnp.float32)
    action = jax.random.normal(ka, (batch, ACTION_DIM), jnp.float32)

    raw = init_raw_params(kp)
    slab = pack_slab(raw)

    q1, q2 = critic_forward(state, action, slab)
    q1 = jax.block_until_ready(q1)
    q2 = jax.block_until_ready(q2)

    r1, r2 = critic_ref(state, action, raw)
    assert q1.shape == (batch, 1) and q2.shape == (batch, 1)
    assert jnp.allclose(q1, r1, atol=1e-5, rtol=1e-5)
    assert jnp.allclose(q2, r2, atol=1e-5, rtol=1e-5)

    print("KERNEL_OK")
</pallas_src>

<mosaic_0001>
module attributes {stable_mosaic.version = 11 : i64} {
  func.func @_critic_kernel(%arg0: memref<8x24xf32, #tpu.memory_space<vmem>>, %arg1: memref<8x8xf32, #tpu.memory_space<vmem>>, %arg2: memref<184x64xf32, #tpu.memory_space<vmem>>, %arg3: memref<8x2xf32, #tpu.memory_space<vmem>>) attributes {dimension_semantics = [], scalar_prefetch = 0 : i64, scratch_operands = 0 : i64, tpu.core_type = #tpu.core_type<tc>} {
    %c0 = arith.constant 0 : index
    %c0_0 = arith.constant 0 : index
    %0 = vector.load %arg2[%c0, %c0_0] : memref<184x64xf32, #tpu.memory_space<vmem>>, vector<24x64xf32>
    %c24 = arith.constant 24 : index
    %c0_1 = arith.constant 0 : index
    %1 = vector.load %arg2[%c24, %c0_1] : memref<184x64xf32, #tpu.memory_space<vmem>>, vector<8x64xf32>
    %c32 = arith.constant 32 : index
    %c0_2 = arith.constant 0 : index
    %2 = vector.load %arg2[%c32, %c0_2] : memref<184x64xf32, #tpu.memory_space<vmem>>, vector<1x64xf32>
    %c40 = arith.constant 40 : index
    %c0_3 = arith.constant 0 : index
    %3 = vector.load %arg2[%c40, %c0_3] : memref<184x64xf32, #tpu.memory_space<vmem>>, vector<1x64xf32>
    %c48 = arith.constant 48 : index
    %c0_4 = arith.constant 0 : index
    %4 = vector.load %arg2[%c48, %c0_4] : memref<184x64xf32, #tpu.memory_space<vmem>>, vector<1x64xf32>
    %c56 = arith.constant 56 : index
    %c0_5 = arith.constant 0 : index
    %5 = vector.load %arg2[%c56, %c0_5] : memref<184x64xf32, #tpu.memory_space<vmem>>, vector<64x64xf32>
    %c120 = arith.constant 120 : index
    %c0_6 = arith.constant 0 : index
    %6 = vector.load %arg2[%c120, %c0_6] : memref<184x64xf32, #tpu.memory_space<vmem>>, vector<64x64xf32>
    %c0_7 = arith.constant 0 : index
    %c0_8 = arith.constant 0 : index
    %7 = vector.load %arg0[%c0_7, %c0_8] : memref<8x24xf32, #tpu.memory_space<vmem>>, vector<8x24xf32>
    %cst = arith.constant dense<0.000000e+00> : vector<8x64xf32>
    %8 = tpu.matmul %7, %0, %cst {dimension_numbers = #tpu.dot_dimension_numbers<[1], [0], [0], [1], [0, 0, 1, 1], [], []>} : vector<8x24xf32>, vector<24x64xf32>, vector<8x64xf32> -> vector<8x64xf32>
    %c0_9 = arith.constant 0 : index
    %c0_10 = arith.constant 0 : index
    %9 = vector.load %arg1[%c0_9, %c0_10] : memref<8x8xf32, #tpu.memory_space<vmem>>, vector<8x8xf32>
    %cst_11 = arith.constant dense<0.000000e+00> : vector<8x64xf32>
    %10 = tpu.matmul %9, %1, %cst_11 {dimension_numbers = #tpu.dot_dimension_numbers<[1], [0], [0], [1], [0, 0, 1, 1], [], []>} : vector<8x8xf32>, vector<8x64xf32>, vector<8x64xf32> -> vector<8x64xf32>
    %11 = arith.addf %8, %10 : vector<8x64xf32>
    %12 = vector.broadcast %2 : vector<1x64xf32> to vector<8x64xf32>
    %13 = arith.addf %11, %12 : vector<8x64xf32>
    %cst_12 = arith.constant 0.000000e+00 : f32
    %14 = vector.broadcast %cst_12 : f32 to vector<8x64xf32>
    %15 = arith.maximumf %13, %14 : vector<8x64xf32>
    %cst_13 = arith.constant dense<0.000000e+00> : vector<8x64xf32>
    %16 = tpu.matmul %15, %5, %cst_13 {dimension_numbers = #tpu.dot_dimension_numbers<[1], [0], [0], [1], [0, 0, 1, 1], [], []>} : vector<8x64xf32>, vector<64x64xf32>, vector<8x64xf32> -> vector<8x64xf32>
    %17 = vector.broadcast %3 : vector<1x64xf32> to vector<8x64xf32>
    %18 = arith.addf %16, %17 : vector<8x64xf32>
    %cst_14 = arith.constant 0.000000e+00 : f32
    %19 = vector.broadcast %cst_14 : f32 to vector<8x64xf32>
    %20 = arith.maximumf %18, %19 : vector<8x64xf32>
    %cst_15 = arith.constant dense<0.000000e+00> : vector<8x64xf32>
    %21 = tpu.matmul %20, %6, %cst_15 {dimension_numbers = #tpu.dot_dimension_numbers<[1], [0], [0], [1], [0, 0, 1, 1], [], []>} : vector<8x64xf32>, vector<64x64xf32>, vector<8x64xf32> -> vector<8x64xf32>
    %22 = vector.broadcast %4 : vector<1x64xf32> to vector<8x64xf32>
    %23 = arith.addf %21, %22 : vector<8x64xf32>
    %24 = vector.extract_strided_slice %23 {offsets = [0, 0], sizes = [8, 2], strides = [1, 1]} : vector<8x64xf32> to vector<8x2xf32>
    %c0_16 = arith.constant 0 : index
    %c0_17 = arith.constant 0 : index
    %25 = vector.load %arg3[%c0_16, %c0_17] : memref<8x2xf32, #tpu.memory_space<vmem>>, vector<8x2xf32>
    tpu.vector_store %arg3[%c0_16, %c0_17], %24 {strides = array<i32>} : memref<8x2xf32, #tpu.memory_space<vmem>>, vector<8x2xf32>,
    return
  }
}

</mosaic_0001>

<llo_original>
// kernel: tpu_custom_call.1
$region0: #{tpu_custom_call.1}
  #allocation0 [shape = 'u32[]', space=smem, size = 0x4, offset = 0x4, fixed_abs, tag = 'smem constant byte address 0x4 - core index']
  #allocation1 [shape = 'u32[144,128]{1,0:T(1,128)}', space=vmem, size = 0x12000, scoped, tag = 'internal scratch']
  %s0 = inlined_call_operand.vmem [shape: f32[8,24], index: 0, kind: input, shape index: {}]
  %s1 = inlined_call_operand.vmem [shape: f32[8,8], index: 1, kind: input, shape index: {}]
  %s2 = inlined_call_operand.vmem [shape: f32[184,64], index: 2, kind: input, shape index: {}]
  %s3 = inlined_call_operand.vmem [shape: f32[8,2], index: 3, kind: output, shape index: {}]
  %s4 = sld [smem:[#allocation0]]
  $region22: #{tpu_custom_call.1} parent=0
    _
  %s6 = ssub.s32 1, %s4
  %s7 = scalar_select 0, %s6, %s4
  // Predicated region
  $region2: #{tpu_custom_call.1} parent=0 // pred_check
    _
  $region3: #{tpu_custom_call.1} parent=0 // pred_check_branch
    %9 = sbr.rel (0) target = $region5
  $region4: #{tpu_custom_call.1} parent=0 // pred_region
    _
  $region5: #{tpu_custom_call.1} parent=0 // pred_fallthru
    _
  // Predicated region
  $region6: #{tpu_custom_call.1} parent=0 // pred_check
    _
  $region7: #{tpu_custom_call.1} parent=0 // pred_check_branch
    %11 = sbr.rel (0) target = $region9
  $region8: #{tpu_custom_call.1} parent=0 // pred_region
    _
  $region9: #{tpu_custom_call.1} parent=0 // pred_fallthru
    _
  // Predicated region
  $region10: #{tpu_custom_call.1} parent=0 // pred_check
    _
  $region11: #{tpu_custom_call.1} parent=0 // pred_check_branch
    %13 = sbr.rel (0) target = $region13
  $region12: #{tpu_custom_call.1} parent=0 // pred_region
    _
  $region13: #{tpu_custom_call.1} parent=0 // pred_fallthru
    _
  %v14 = vld [vmem:[%s2] sm:$0xff]
  %v15 = vld [vmem:[%s2 + $0x8] sm:$0xff]
  %v16 = vld [vmem:[%s2 + $0x10] sm:$0xff]
  %v17 = vld [vmem:[%s2 + $0x18] sm:$0xff]
  %v18 = vld [vmem:[%s2 + $0x20] sm:$0x1]
  %v19 = vld [vmem:[%s2 + $0x28] sm:$0x1]
  %v20 = vld [vmem:[%s2 + $0x30] sm:$0x1]
  %v21 = vld [vmem:[%s2 + $0x38] sm:$0xff]
  %v22 = vld [vmem:[%s2 + $0x40] sm:$0xff]
  %v23 = vld [vmem:[%s2 + $0x48] sm:$0xff]
  %v24 = vld [vmem:[%s2 + $0x50] sm:$0xff]
  %v25 = vld [vmem:[%s2 + $0x58] sm:$0xff]
  %v26 = vld [vmem:[%s2 + $0x60] sm:$0xff]
  %v27 = vld [vmem:[%s2 + $0x68] sm:$0xff]
  %v28 = vld [vmem:[%s2 + $0x70] sm:$0xff]
  %v29 = vld [vmem:[%s2 + $0x78] sm:$0xff]
  %v30 = vld [vmem:[%s2 + $0x80] sm:$0xff]
  %v31 = vld [vmem:[%s2 + $0x88] sm:$0xff]
  %v32 = vld [vmem:[%s2 + $0x90] sm:$0xff]
  %v33 = vld [vmem:[%s2 + $0x98] sm:$0xff]
  %v34 = vld [vmem:[%s2 + $0xa0] sm:$0xff]
  %v35 = vld [vmem:[%s2 + $0xa8] sm:$0xff]
  %v36 = vld [vmem:[%s2 + $0xb0] sm:$0xff]
  %v37 = vld [vmem:[%s0] sm:$0xff]
  %v38 = vld [vmem:[%s1] sm:$0xff]
  %vm39 = vcmask 64512
  %v41 = vsel %vm39, %v38, 0
  %43 = vmatprep.subr.mxu0 0.0
  %44 = vmatpush1.msra.mxu0 %v17
  %45 = vmatprep.subr.mxu0 0.0
  %46 = vmatpush1.msra.mxu0 0.0
  %47 = vmatprep.subr.mxu0 0.0
  %48 = vmatpush1.msra.mxu0 0.0
  %49 = vmatprep.subr.mxu0 0.0
  %50 = vmatpush1.msra.mxu0 0.0
  %51 = vmatprep.subr.mxu0 0.0
  %52 = vmatpush1.msra.mxu0 0.0
  %53 = vmatprep.subr.mxu0 0.0
  %54 = vmatpush1.msra.mxu0 0.0
  %55 = vmatprep.subr.mxu0 0.0
  %56 = vmatpush1.msra.mxu0 0.0
  %57 = vmatprep.subr.mxu0 0.0
  %58 = vmatpush1.msra.mxu0 0.0
  %59 = vmatprep.subr.mxu0 0.0
  %60 = vmatpush1.msra.mxu0 0.0
  %61 = vmatprep.subr.mxu0 0.0
  %62 = vmatpush1.msra.mxu0 0.0
  %63 = vmatprep.subr.mxu0 0.0
  %64 = vmatpush1.msra.mxu0 0.0
  %65 = vmatprep.subr.mxu0 0.0
  %66 = vmatpush1.msra.mxu0 0.0
  %67 = vmatprep.subr.mxu0 0.0
  %68 = vmatpush1.msra.mxu0 0.0
  %69 = vmatprep.subr.mxu0 0.0
  %70 = vmatpush1.msra.mxu0 0.0
  %71 = vmatprep.subr.mxu0 0.0
  %72 = vmatpush1.msra.mxu0 0.0
  %73 = vmatprep.subr.mxu0 0.0
  %74 = vmatpush1.msra.mxu0 0.0
  %75 = vmatprep.subr.mxu0 0.0
  %76 = vmatpush1.msra.mxu0 0.0
  %77 = vmatprep.subr.mxu0 0.0
  %78 = vmatpush1.msra.mxu0 0.0
  %79 = vmatprep.subr.mxu0 0.0
  %80 = vmatpush1.msra.mxu0 0.0
  %81 = vmatprep.subr.mxu0 0.0
  %82 = vmatpush1.msra.mxu0 0.0
  %83 = vmatprep.subr.mxu0 0.0
  %84 = vmatpush1.msra.mxu0 0.0
  %85 = vmatprep.subr.mxu0 0.0
  %86 = vmatpush1.msra.mxu0 0.0
  %87 = vmatprep.subr.mxu0 0.0
  %88 = vmatpush1.msra.mxu0 0.0
  %89 = vmatprep.subr.mxu0 0.0
  %90 = vmatpush1.msra.mxu0 0.0
  %91 = vmatprep.subr.mxu0 0.0
  %92 = vmatpush1.msra.mxu0 0.0
  %93 = vmatprep.subr.mxu0 0.0
  %94 = vmatpush1.msra.mxu0 0.0
  %95 = vmatprep.subr.mxu0 0.0
  %96 = vmatpush1.msra.mxu0 0.0
  %97 = vmatprep.subr.mxu0 0.0
  %98 = vmatpush1.msra.mxu0 0.0
  %99 = vmatprep.subr.mxu0 0.0
  %100 = vmatpush1.msra.mxu0 0.0
  %101 = vmatprep.subr.mxu0 0.0
  %102 = vmatpush1.msra.mxu0 0.0
  %103 = vmatprep.subr.mxu0 0.0
  %104 = vmatpush1.msra.mxu0 0.0
  %105 = vmatprep.subr.mxu0 0.0
  %106 = vmatpush1.msra.mxu0 0.0
  %107 = vmatprep.mubr.f32.mxu0 0.0
  %108 = vmatmul.mubr.f32.gmra.mrb[0].mxu0 %v41
  %v109 = vpop.f32.mrb[0].mxu0
  %v110 = vadd.f32 0.0, %v109
  %v111 = vpop.f32.mrb[0].mxu0
  %112 = vdwg.mxu0
  %vm113 = vcmask 195584
  %v115 = vsel %vm113, %v37, 0
  %117 = vmatprep.subr.mxu0 0.0
  %118 = vmatpush1.msra.mxu0 %v14
  %119 = vmatprep.subr.mxu0 0.0
  %120 = vmatpush1.msra.mxu0 %v15
  %121 = vmatprep.subr.mxu0 0.0
  %122 = vmatpush1.msra.mxu0 %v16
  %123 = vmatprep.subr.mxu0 0.0
  %124 = vmatpush1.msra.mxu0 0.0
  %125 = vmatprep.subr.mxu0 0.0
  %126 = vmatpush1.msra.mxu0 0.0
  %127 = vmatprep.subr.mxu0 0.0
  %128 = vmatpush1.msra.mxu0 0.0
  %129 = vmatprep.subr.mxu0 0.0
  %130 = vmatpush1.msra.mxu0 0.0
  %131 = vmatprep.subr.mxu0 0.0
  %132 = vmatpush1.msra.mxu0 0.0
  %133 = vmatprep.subr.mxu0 0.0
  %134 = vmatpush1.msra.mxu0 0.0
  %135 = vmatprep.subr.mxu0 0.0
  %136 = vmatpush1.msra.mxu0 0.0
  %137 = vmatprep.subr.mxu0 0.0
  %138 = vmatpush1.msra.mxu0 0.0
  %139 = vmatprep.subr.mxu0 0.0
  %140 = vmatpush1.msra.mxu0 0.0
  %141 = vmatprep.subr.mxu0 0.0
  %142 = vmatpush1.msra.mxu0 0.0
  %143 = vmatprep.subr.mxu0 0.0
  %144 = vmatpush1.msra.mxu0 0.0
  %145 = vmatprep.subr.mxu0 0.0
  %146 = vmatpush1.msra.mxu0 0.0
  %147 = vmatprep.subr.mxu0 0.0
  %148 = vmatpush1.msra.mxu0 0.0
  %149 = vmatprep.subr.mxu0 0.0
  %150 = vmatpush1.msra.mxu0 0.0
  %151 = vmatprep.subr.mxu0 0.0
  %152 = vmatpush1.msra.mxu0 0.0
  %153 = vmatprep.subr.mxu0 0.0
  %154 = vmatpush1.msra.mxu0 0.0
  %155 = vmatprep.subr.mxu0 0.0
  %156 = vmatpush1.msra.mxu0 0.0
  %157 = vmatprep.subr.mxu0 0.0
  %158 = vmatpush1.msra.mxu0 0.0
  %159 = vmatprep.subr.mxu0 0.0
  %160 = vmatpush1.msra.mxu0 0.0
  %161 = vmatprep.subr.mxu0 0.0
  %162 = vmatpush1.msra.mxu0 0.0
  %163 = vmatprep.subr.mxu0 0.0
  %164 = vmatpush1.msra.mxu0 0.0
  %165 = vmatprep.subr.mxu0 0.0
  %166 = vmatpush1.msra.mxu0 0.0
  %167 = vmatprep.subr.mxu0 0.0
  %168 = vmatpush1.msra.mxu0 0.0
  %169 = vmatprep.subr.mxu0 0.0
  %170 = vmatpush1.msra.mxu0 0.0
  %171 = vmatprep.subr.mxu0 0.0
  %172 = vmatpush1.msra.mxu0 0.0
  %173 = vmatprep.subr.mxu0 0.0
  %174 = vmatpush1.msra.mxu0 0.0
  %175 = vmatprep.subr.mxu0 0.0
  %176 = vmatpush1.msra.mxu0 0.0
  %177 = vmatprep.subr.mxu0 0.0
  %178 = vmatpush1.msra.mxu0 0.0
  %179 = vmatprep.subr.mxu0 0.0
  %180 = vmatpush1.msra.mxu0 0.0
  %181 = vmatprep.mubr.f32.mxu0 0.0
  %182 = vmatmul.mubr.f32.gmra.mrb[0].mxu0 %v115
  %v183 = vpop.f32.mrb[0].mxu0
  %v184 = vadd.f32 %v110, %v183
  %v185 = vpop.f32.mrb[0].mxu0
  %186 = vdwg.mxu0
  %v187 = vlaneseq
  %v188 = vshrl.u32 %v187, 7
  %v189 = vsub.s32 0, %v188
  %v190 = vrot.slane %v18, %v189
  %v191 = vadd.f32 %v184, %v190
  %v192 = vmax.f32 %v191, 0.0
  %v193 = vlaneseq
  %v194 = vshrl.u32 %v193, 7
  %v195 = vsub.s32 0, %v194
  %v196 = vrot.slane %v19, %v195
  %vm197 = vcmask 523264
  %v199 = vsel %vm197, %v192, 0
  %201 = vmatprep.subr.mxu0 0.0
  %202 = vmatpush1.msra.mxu0 %v21
  %203 = vmatprep.subr.mxu0 0.0
  %204 = vmatpush1.msra.mxu0 %v22
  %205 = vmatprep.subr.mxu0 0.0
  %206 = vmatpush1.msra.mxu0 %v23
  %207 = vmatprep.subr.mxu0 0.0
  %208 = vmatpush1.msra.mxu0 %v24
  %209 = vmatprep.subr.mxu0 0.0
  %210 = vmatpush1.msra.mxu0 %v25
  %211 = vmatprep.subr.mxu0 0.0
  %212 = vmatpush1.msra.mxu0 %v26
  %213 = vmatprep.subr.mxu0 0.0
  %214 = vmatpush1.msra.mxu0 %v27
  %215 = vmatprep.subr.mxu0 0.0
  %216 = vmatpush1.msra.mxu0 %v28
  %217 = vmatprep.subr.mxu0 0.0
  %218 = vmatpush1.msra.mxu0 0.0
  %219 = vmatprep.subr.mxu0 0.0
  %220 = vmatpush1.msra.mxu0 0.0
  %221 = vmatprep.subr.mxu0 0.0
  %222 = vmatpush1.msra.mxu0 0.0
  %223 = vmatprep.subr.mxu0 0.0
  %224 = vmatpush1.msra.mxu0 0.0
  %225 = vmatprep.subr.mxu0 0.0
  %226 = vmatpush1.msra.mxu0 0.0
  %227 = vmatprep.subr.mxu0 0.0
  %228 = vmatpush1.msra.mxu0 0.0
  %229 = vmatprep.subr.mxu0 0.0
  %230 = vmatpush1.msra.mxu0 0.0
  %231 = vmatprep.subr.mxu0 0.0
  %232 = vmatpush1.msra.mxu0 0.0
  %233 = vmatprep.subr.mxu0 0.0
  %234 = vmatpush1.msra.mxu0 0.0
  %235 = vmatprep.subr.mxu0 0.0
  %236 = vmatpush1.msra.mxu0 0.0
  %237 = vmatprep.subr.mxu0 0.0
  %238 = vmatpush1.msra.mxu0 0.0
  %239 = vmatprep.subr.mxu0 0.0
  %240 = vmatpush1.msra.mxu0 0.0
  %241 = vmatprep.subr.mxu0 0.0
  %242 = vmatpush1.msra.mxu0 0.0
  %243 = vmatprep.subr.mxu0 0.0
  %244 = vmatpush1.msra.mxu0 0.0
  %245 = vmatprep.subr.mxu0 0.0
  %246 = vmatpush1.msra.mxu0 0.0
  %247 = vmatprep.subr.mxu0 0.0
  %248 = vmatpush1.msra.mxu0 0.0
  %249 = vmatprep.subr.mxu0 0.0
  %250 = vmatpush1.msra.mxu0 0.0
  %251 = vmatprep.subr.mxu0 0.0
  %252 = vmatpush1.msra.mxu0 0.0
  %253 = vmatprep.subr.mxu0 0.0
  %254 = vmatpush1.msra.mxu0 0.0
  %255 = vmatprep.subr.mxu0 0.0
  %256 = vmatpush1.msra.mxu0 0.0
  %257 = vmatprep.subr.mxu0 0.0
  %258 = vmatpush1.msra.mxu0 0.0
  %259 = vmatprep.subr.mxu0 0.0
  %260 = vmatpush1.msra.mxu0 0.0
  %261 = vmatprep.subr.mxu0 0.0
  %262 = vmatpush1.msra.mxu0 0.0
  %263 = vmatprep.subr.mxu0 0.0
  %264 = vmatpush1.msra.mxu0 0.0
  %265 = vmatprep.mubr.f32.mxu0 0.0
  %266 = vmatmul.mubr.f32.gmra.mrb[0].mxu0 %v199
  %v267 = vpop.f32.mrb[0].mxu0
  %v268 = vadd.f32 %v196, %v267
  %v269 = vpop.f32.mrb[0].mxu0
  %270 = vdwg.mxu0
  %v271 = vmax.f32 %v268, 0.0
  %v272 = vlaneseq
  %v273 = vshrl.u32 %v272, 7
  %v274 = vsub.s32 0, %v273
  %v275 = vrot.slane %v20, %v274
  %v277 = vsel %vm197, %v271, 0
  %279 = vmatprep.subr.mxu0 0.0
  %280 = vmatpush1.msra.mxu0 %v29
  %281 = vmatprep.subr.mxu0 0.0
  %282 = vmatpush1.msra.mxu0 %v30
  %283 = vmatprep.subr.mxu0 0.0
  %284 = vmatpush1.msra.mxu0 %v31
  %285 = vmatprep.subr.mxu0 0.0
  %286 = vmatpush1.msra.mxu0 %v32
  %287 = vmatprep.subr.mxu0 0.0
  %288 = vmatpush1.msra.mxu0 %v33
  %289 = vmatprep.subr.mxu0 0.0
  %290 = vmatpush1.msra.mxu0 %v34
  %291 = vmatprep.subr.mxu0 0.0
  %292 = vmatpush1.msra.mxu0 %v35
  %293 = vmatprep.subr.mxu0 0.0
  %294 = vmatpush1.msra.mxu0 %v36
  %295 = vmatprep.subr.mxu0 0.0
  %296 = vmatpush1.msra.mxu0 0.0
  %297 = vmatprep.subr.mxu0 0.0
  %298 = vmatpush1.msra.mxu0 0.0
  %299 = vmatprep.subr.mxu0 0.0
  %300 = vmatpush1.msra.mxu0 0.0
  %301 = vmatprep.subr.mxu0 0.0
  %302 = vmatpush1.msra.mxu0 0.0
  %303 = vmatprep.subr.mxu0 0.0
  %304 = vmatpush1.msra.mxu0 0.0
  %305 = vmatprep.subr.mxu0 0.0
  %306 = vmatpush1.msra.mxu0 0.0
  %307 = vmatprep.subr.mxu0 0.0
  %308 = vmatpush1.msra.mxu0 0.0
  %309 = vmatprep.subr.mxu0 0.0
  %310 = vmatpush1.msra.mxu0 0.0
  %311 = vmatprep.subr.mxu0 0.0
  %312 = vmatpush1.msra.mxu0 0.0
  %313 = vmatprep.subr.mxu0 0.0
  %314 = vmatpush1.msra.mxu0 0.0
  %315 = vmatprep.subr.mxu0 0.0
  %316 = vmatpush1.msra.mxu0 0.0
  %317 = vmatprep.subr.mxu0 0.0
  %318 = vmatpush1.msra.mxu0 0.0
  %319 = vmatprep.subr.mxu0 0.0
  %320 = vmatpush1.msra.mxu0 0.0
  %321 = vmatprep.subr.mxu0 0.0
  %322 = vmatpush1.msra.mxu0 0.0
  %323 = vmatprep.subr.mxu0 0.0
  %324 = vmatpush1.msra.mxu0 0.0
  %325 = vmatprep.subr.mxu0 0.0
  %326 = vmatpush1.msra.mxu0 0.0
  %327 = vmatprep.subr.mxu0 0.0
  %328 = vmatpush1.msra.mxu0 0.0
  %329 = vmatprep.subr.mxu0 0.0
  %330 = vmatpush1.msra.mxu0 0.0
  %331 = vmatprep.subr.mxu0 0.0
  %332 = vmatpush1.msra.mxu0 0.0
  %333 = vmatprep.subr.mxu0 0.0
  %334 = vmatpush1.msra.mxu0 0.0
  %335 = vmatprep.subr.mxu0 0.0
  %336 = vmatpush1.msra.mxu0 0.0
  %337 = vmatprep.subr.mxu0 0.0
  %338 = vmatpush1.msra.mxu0 0.0
  %339 = vmatprep.subr.mxu0 0.0
  %340 = vmatpush1.msra.mxu0 0.0
  %341 = vmatprep.subr.mxu0 0.0
  %342 = vmatpush1.msra.mxu0 0.0
  %343 = vmatprep.mubr.f32.mxu0 0.0
  %344 = vmatmul.mubr.f32.gmra.mrb[0].mxu0 %v277
  %v345 = vpop.f32.mrb[0].mxu0
  %v346 = vadd.f32 %v275, %v345
  %v347 = vpop.f32.mrb[0].mxu0
  %348 = vdwg.mxu0
  %vm349 = vcmask 15360
  %350 = vst.msk [vmem:[%s3] sm:$0xff] %vm349, %v346
  // Predicated region
  $region14: #{tpu_custom_call.1} parent=0 // pred_check
    _
  $region15: #{tpu_custom_call.1} parent=0 // pred_check_branch
    %352 = sbr.rel (0) target = $region17
  $region16: #{tpu_custom_call.1} parent=0 // pred_region
    _
  $region17: #{tpu_custom_call.1} parent=0 // pred_fallthru
    _
  // Predicated region
  $region18: #{tpu_custom_call.1} parent=0 // pred_check
    _
  $region19: #{tpu_custom_call.1} parent=0 // pred_check_branch
    %354 = sbr.rel (0) target = $region21
  $region20: #{tpu_custom_call.1} parent=0 // pred_region
    _
  $region21: #{tpu_custom_call.1} parent=0 // pred_fallthru
    _

</llo_original>
